<compile_context>
chip_gen: v7x
topology: tpu7x:2x2x1
jax: 0.10.0
libtpu: 0.0.40
codegen_flags: <defaults>
</compile_context>

<pallas_src>
import functools

import jax
import jax.numpy as jnp
from jax import lax
from jax.experimental import pallas as pl
from jax.experimental.pallas import tpu as pltpu


# ---------------------------------------------------------------------------
# Kernel
# ---------------------------------------------------------------------------
def _linear_kernel(x_ref, w_ref, b_ref, o_ref, acc_ref=None, *, rhs_contract_dim):
    """One (tm, tn) output tile, accumulated over the K grid axis (axis 2).

    x_ref  : (tm, tk)              activation tile
    w_ref  : (tn, tk) or (tk, tn)  weight tile; contraction dim is static
    b_ref  : (1, tn) f32           bias tile (broadcast over rows)
    o_ref  : (tm, tn)              output tile (resident across the K axis)
    acc_ref: optional (tm, tn) f32 scratch; only used when o_ref is not f32.
    """
    k = pl.program_id(2)
    acc = o_ref if acc_ref is None else acc_ref

    @pl.when(k == 0)
    def _():
        acc[...] = jnp.zeros(acc.shape, acc.dtype)

    acc[...] += lax.dot_general(
        x_ref[...], w_ref[...],
        dimension_numbers=(((1,), (rhs_contract_dim,)), ((), ())),
        preferred_element_type=jnp.float32,
    )

    @pl.when(k == pl.num_programs(2) - 1)
    def _():
        if acc_ref is None:           # f32 output: accumulator IS the output
            o_ref[...] += b_ref[...]
        else:                         # low-precision output: cast once at the end
            o_ref[...] = (acc_ref[...] + b_ref[...]).astype(o_ref.dtype)


# ---------------------------------------------------------------------------
# Tile selection
# ---------------------------------------------------------------------------
_TM_CANDIDATES = (512, 256, 128, 64, 32, 16, 8)
_TN_CANDIDATES = (1024, 768, 512, 256, 128)
_TK_CANDIDATES = (2048, 1536, 1024, 768, 512, 256, 128)

_TM_FULL_CAP, _TN_FULL_CAP, _TK_FULL_CAP = 512, 1024, 2048

_VMEM_TILE_BUDGET = 20 * 1024 * 1024    # target for the double-buffered working set
_VMEM_LIMIT_BYTES = 32 * 1024 * 1024    # safe on v5e/v6e (128 MiB) and v7x (64 MiB)

_MEGACORE_FLOP_THRESHOLD = 1 << 31      # only split a (1,1,.) grid for big problems
_FAST_PATH_MAX_ELEMS = 128 * 128 * 128  # below this, grid overhead > compute


def _tile_chain(dim, candidates, full_cap):
    """Preference-ordered (best first) legal tile sizes for one dimension."""
    chain = [dim] if dim <= full_cap else []     # full dim => other operand read once
    chain += [c for c in candidates if c <= dim and dim % c == 0 and c != dim]
    if not chain:
        chain = [dim]                            # full dim is always a legal block
    return chain


def _workset_bytes(tm, tn, tk, in_bytes, out_bytes, use_scratch):
    ws = 2 * (tm * tk + tn * tk) * in_bytes + 2 * tn * 4   # double-buffered inputs + bias
    ws += 2 * tm * tn * out_bytes                          # double-buffered output block
    if use_scratch:
        ws += tm * tn * 4                                  # f32 accumulator scratch
    return ws


def _select_tiles(M, N, K, in_bytes, out_bytes, use_scratch):
    chain_m = _tile_chain(M, _TM_CANDIDATES, _TM_FULL_CAP)
    chain_n = _tile_chain(N, _TN_CANDIDATES, _TN_FULL_CAP)
    chain_k = _tile_chain(K, _TK_CANDIDATES, _TK_FULL_CAP)
    im = jn = ik = 0

    def ws():
        return _workset_bytes(chain_m[im], chain_n[jn], chain_k[ik],
                              in_bytes, out_bytes, use_scratch)

    # Greedily shrink the largest tile until the working set fits the budget.
    while ws() > _VMEM_TILE_BUDGET:
        options = []
        if ik + 1 < len(chain_k):
            options.append((chain_k[ik], "k"))
        if jn + 1 < len(chain_n):
            options.append((chain_n[jn], "n"))
        if im + 1 < len(chain_m):
            options.append((chain_m[im], "m"))
        if not options:
            break
        _, which = max(options)
        if which == "k":
            ik += 1
        elif which == "n":
            jn += 1
        else:
            im += 1

    tm, tn, tk = chain_m[im], chain_n[jn], chain_k[ik]

    # v7x has 2 TensorCores fed via the "parallel" grid axes; if the (i, j)
    # grid collapsed to a single program and the problem is compute-heavy,
    # split the dimension whose re-streamed operand costs the least extra HBM.
    if (-(-M // tm)) * (-(-N // tn)) == 1 and 2 * M * N * K >= _MEGACORE_FLOP_THRESHOLD:
        if M <= N and jn + 1 < len(chain_n):       # splitting N re-streams x (cheap)
            tn = chain_n[jn + 1]
        elif im + 1 < len(chain_m):                # splitting M re-streams W
            tm = chain_m[im + 1]

    return tm, tn, tk


# ---------------------------------------------------------------------------
# Wrapper
# ---------------------------------------------------------------------------
@functools.partial(
    jax.jit, static_argnames=("tm", "tn", "tk", "compute_dtype", "allow_fast_path"))
def linear_grad_forward(x, weight, bias, *, tm=None, tn=None, tk=None,
                        compute_dtype=None, allow_fast_path=True):
    """Equivalent of LinearGrad.forward: x @ weight.T + bias.

    x:      (M, K)   activations
    weight: (N, K)   PyTorch nn.Linear layout (out_dim x in_dim)
    bias:   (N,)
    compute_dtype: optional narrower MXU feed dtype (e.g. jnp.bfloat16);
      accumulation stays f32 and the output keeps x.dtype.
    """
    M, K = x.shape
    N, K2 = weight.shape
    if K != K2:
        raise ValueError("weight in_dim must match x feature dim")
    if bias.shape != (N,):
        raise ValueError("bias must have shape (out_dim,)")

    out_dtype = x.dtype

    # Tiny problems: Pallas grid/launch overhead exceeds the math.
    if allow_fast_path and M * N * K <= _FAST_PATH_MAX_ELEMS:
        return (x @ weight.T + bias[None, :]).astype(out_dtype)

    comp_dtype = jnp.dtype(compute_dtype) if compute_dtype is not None else jnp.dtype(out_dtype)
    x_c = x.astype(comp_dtype)
    w_c = weight.astype(comp_dtype)
    b2d = bias.astype(jnp.float32).reshape(1, N)

    in_bytes = comp_dtype.itemsize
    out_bytes = jnp.dtype(out_dtype).itemsize
    use_scratch = jnp.dtype(out_dtype) != jnp.dtype(jnp.float32)

    sel_tm, sel_tn, sel_tk = _select_tiles(M, N, K, in_bytes, out_bytes, use_scratch)
    tm = sel_tm if tm is None else tm
    tn = sel_tn if tn is None else tn
    tk = sel_tk if tk is None else tk

    # Validate user-supplied tiles (the defaults always satisfy these).
    if K % tk != 0:
        raise ValueError("tk must divide K: a padded partial K tile would be "
                         "accumulated unmasked")
    if not (tm == M or tm % 8 == 0) or not (tn == N or tn % 128 == 0) \
            or not (tk == K or tk % 128 == 0):
        raise ValueError("tiles must be (8,128)-aligned or cover the full dim")

    grid = (pl.cdiv(M, tm), pl.cdiv(N, tn), pl.cdiv(K, tk))

    # Weight layout: with a single M tile (small-batch / inference) contract the
    # PyTorch (N, K) layout directly -- no transpose anywhere.  When the weight
    # is re-read for several M tiles, pay a one-time HBM transpose to (K, N) so
    # the MXU sees the natural contract-major / lane=N RHS layout and no
    # per-K-step in-kernel transpose can appear.
    if grid[0] > 1:
        w_in = w_c.T                                             # (K, N)
        w_spec = pl.BlockSpec((tk, tn), lambda i, j, k: (k, j))
        rhs_contract_dim = 0
    else:
        w_in = w_c                                               # (N, K)
        w_spec = pl.BlockSpec((tn, tk), lambda i, j, k: (j, k))
        rhs_contract_dim = 1

    scratch = (pltpu.VMEM((tm, tn), jnp.float32),) if use_scratch else ()
    kernel = functools.partial(_linear_kernel, rhs_contract_dim=rhs_contract_dim)

    cost = pl.CostEstimate(
        flops=2 * M * N * K,
        transcendentals=0,
        bytes_accessed=(M * K + N * K) * in_bytes + N * 4 + M * N * out_bytes,
    )

    return pl.pallas_call(
        kernel,
        out_shape=jax.ShapeDtypeStruct((M, N), out_dtype),
        grid_spec=pltpu.PrefetchScalarGridSpec(
            num_scalar_prefetch=0,
            grid=grid,
            in_specs=[
                pl.BlockSpec((tm, tk), lambda i, j, k: (i, k)),   # x tile
                w_spec,                                           # weight tile
                pl.BlockSpec((1, tn), lambda i, j, k: (0, j)),    # bias tile
            ],
            out_specs=pl.BlockSpec((tm, tn), lambda i, j, k: (i, j)),
            scratch_shapes=scratch,
        ),
        compiler_params=pltpu.CompilerParams(
            # M and N tiles are independent -> shardable across v7x's 2 TCs;
            # K carries the accumulation -> "arbitrary", kept last.
            dimension_semantics=("parallel", "parallel", "arbitrary"),
            vmem_limit_bytes=_VMEM_LIMIT_BYTES,
        ),
        cost_estimate=cost,
    )(x_c, w_in, b2d)


def reference_forward(x, weight, bias):
    return x @ weight.T + bias


if __name__ == "__main__":
    key = jax.random.PRNGKey(0)
    kx, kw, kb, kx2, kw2, kb2 = jax.random.split(key, 6)

    # --- Small shape consistent with the module: batch=8, in_dim=32, out_dim=32.
    batch, in_dim, out_dim = 8, 32, 32
    bound = 1.0 / jnp.sqrt(jnp.float32(in_dim))
    weight = jax.random.uniform(kw, (out_dim, in_dim), jnp.float32, -bound, bound)
    bias = jax.random.uniform(kb, (out_dim,), jnp.float32, -bound, bound)
    x = jax.random.normal(kx, (batch, in_dim), jnp.float32)
    ref = reference_forward(x, weight, bias)

    # Force the Pallas path even though the shape is tiny.
    out = jax.block_until_ready(
        linear_grad_forward(x, weight, bias, allow_fast_path=False))
    assert out.shape == (batch, out_dim)
    assert jnp.allclose(out, ref, atol=1e-5, rtol=1e-5), "mismatch (small, pallas)"

    # Default path (tiny problem -> XLA fast path).
    out_fast = jax.block_until_ready(linear_grad_forward(x, weight, bias))
    assert jnp.allclose(out_fast, ref, atol=1e-5, rtol=1e-5), "mismatch (small, fast)"

    # --- Larger shape: exercises tile selection, the K loop and bias epilogue.
    M2, K2, N2 = 256, 512, 384
    bound2 = 1.0 / jnp.sqrt(jnp.float32(K2))
    weight2 = jax.random.uniform(kw2, (N2, K2), jnp.float32, -bound2, bound2)
    bias2 = jax.random.uniform(kb2, (N2,), jnp.float32, -bound2, bound2)
    x2 = jax.random.normal(kx2, (M2, K2), jnp.float32)
    ref2 = reference_forward(x2, weight2, bias2)

    out2 = jax.block_until_ready(linear_grad_forward(x2, weight2, bias2))
    assert out2.shape == (M2, N2)
    assert jnp.allclose(out2, ref2, atol=1e-4, rtol=1e-4), "mismatch (tiled f32)"

    # Explicit tiles: multi-block grid over M, N and K + transposed-weight path.
    out2b = jax.block_until_ready(
        linear_grad_forward(x2, weight2, bias2, tm=128, tn=128, tk=128))
    assert jnp.allclose(out2b, ref2, atol=1e-4, rtol=1e-4), "mismatch (explicit tiles)"

    # bf16 MXU feed with f32 accumulation (opt-in; tolerance loosened by design).
    out3 = jax.block_until_ready(
        linear_grad_forward(x2, weight2, bias2, compute_dtype=jnp.bfloat16))
    assert jnp.allclose(out3, ref2, atol=2e-2, rtol=2e-2), "mismatch (bf16 compute)"

    print("KERNEL_OK")
</pallas_src>

<mosaic_0001>
module attributes {stable_mosaic.version = 11 : i64} {
  func.func @_linear_kernel(%arg0: i32, %arg1: i32, %arg2: i32, %arg3: memref<8x32xf32, #tpu.memory_space<vmem>>, %arg4: memref<32x32xf32, #tpu.memory_space<vmem>>, %arg5: memref<1x32xf32, #tpu.memory_space<vmem>>, %arg6: memref<8x32xf32, #tpu.memory_space<vmem>>) attributes {dimension_semantics = [#tpu.dimension_semantics<parallel>, #tpu.dimension_semantics<parallel>, #tpu.dimension_semantics<arbitrary>], iteration_bounds = array<i64: 1, 1, 1>, scalar_prefetch = 0 : i64, scratch_operands = 0 : i64, tpu.core_type = #tpu.core_type<tc>, window_params = [{transform_indices = @transform_0, window_bounds = array<i64: 8, 32>}, {transform_indices = @transform_1, window_bounds = array<i64: 32, 32>}, {transform_indices = @transform_2, window_bounds = array<i64: 1, 32>}, {transform_indices = @transform_3, window_bounds = array<i64: 8, 32>}]} {
    %c0_i32 = arith.constant 0 : i32
    %0 = arith.cmpi eq, %arg2, %c0_i32 : i32
    %1 = arith.extui %0 : i1 to i32
    %c0_i32_0 = arith.constant 0 : i32
    %2 = arith.cmpi ne, %1, %c0_i32_0 : i32
    scf.if %2 {
      %cst_10 = arith.constant 0.000000e+00 : f32
      %12 = vector.broadcast %cst_10 : f32 to vector<8x32xf32>
      %c0_11 = arith.constant 0 : index
      %c0_12 = arith.constant 0 : index
      %13 = vector.load %arg6[%c0_11, %c0_12] : memref<8x32xf32, #tpu.memory_space<vmem>>, vector<8x32xf32>
      tpu.vector_store %arg6[%c0_11, %c0_12], %12 {strides = array<i32>} : memref<8x32xf32, #tpu.memory_space<vmem>>, vector<8x32xf32>,
    } else {
    }
    %c0 = arith.constant 0 : index
    %c0_1 = arith.constant 0 : index
    %3 = vector.load %arg6[%c0, %c0_1] : memref<8x32xf32, #tpu.memory_space<vmem>>, vector<8x32xf32>
    %c0_2 = arith.constant 0 : index
    %c0_3 = arith.constant 0 : index
    %4 = vector.load %arg3[%c0_2, %c0_3] : memref<8x32xf32, #tpu.memory_space<vmem>>, vector<8x32xf32>
    %c0_4 = arith.constant 0 : index
    %c0_5 = arith.constant 0 : index
    %5 = vector.load %arg4[%c0_4, %c0_5] : memref<32x32xf32, #tpu.memory_space<vmem>>, vector<32x32xf32>
    %cst = arith.constant dense<0.000000e+00> : vector<8x32xf32>
    %6 = tpu.matmul %4, %5, %cst {dimension_numbers = #tpu.dot_dimension_numbers<[1], [1], [0], [0], [0, 0, 1, 0], [], []>} : vector<8x32xf32>, vector<32x32xf32>, vector<8x32xf32> -> vector<8x32xf32>
    %7 = arith.addf %3, %6 : vector<8x32xf32>
    %c0_6 = arith.constant 0 : index
    %c0_7 = arith.constant 0 : index
    %8 = vector.load %arg6[%c0_6, %c0_7] : memref<8x32xf32, #tpu.memory_space<vmem>>, vector<8x32xf32>
    tpu.vector_store %arg6[%c0_6, %c0_7], %7 {strides = array<i32>} : memref<8x32xf32, #tpu.memory_space<vmem>>, vector<8x32xf32>,
    %c0_i32_8 = arith.constant 0 : i32
    %9 = arith.cmpi eq, %arg2, %c0_i32_8 : i32
    %10 = arith.extui %9 : i1 to i32
    %c0_i32_9 = arith.constant 0 : i32
    %11 = arith.cmpi ne, %10, %c0_i32_9 : i32
    scf.if %11 {
      %c0_10 = arith.constant 0 : index
      %c0_11 = arith.constant 0 : index
      %12 = vector.load %arg6[%c0_10, %c0_11] : memref<8x32xf32, #tpu.memory_space<vmem>>, vector<8x32xf32>
      %c0_12 = arith.constant 0 : index
      %c0_13 = arith.constant 0 : index
      %13 = vector.load %arg5[%c0_12, %c0_13] : memref<1x32xf32, #tpu.memory_space<vmem>>, vector<1x32xf32>
      %14 = vector.broadcast %13 : vector<1x32xf32> to vector<8x32xf32>
      %15 = arith.addf %12, %14 : vector<8x32xf32>
      %c0_14 = arith.constant 0 : index
      %c0_15 = arith.constant 0 : index
      %16 = vector.load %arg6[%c0_14, %c0_15] : memref<8x32xf32, #tpu.memory_space<vmem>>, vector<8x32xf32>
      tpu.vector_store %arg6[%c0_14, %c0_15], %15 {strides = array<i32>} : memref<8x32xf32, #tpu.memory_space<vmem>>, vector<8x32xf32>,
    } else {
    }
    return
  }
  func.func @transform_0(%arg0: i32, %arg1: i32, %arg2: i32) -> (i32, i32) {
    %c0_i32 = arith.constant 0 : i32
    return %arg0, %arg2 : i32, i32
  }
  func.func @transform_1(%arg0: i32, %arg1: i32, %arg2: i32) -> (i32, i32) {
    %c0_i32 = arith.constant 0 : i32
    return %arg1, %arg2 : i32, i32
  }
  func.func @transform_2(%arg0: i32, %arg1: i32, %arg2: i32) -> (i32, i32) {
    %c0_i32 = arith.constant 0 : i32
    %c0_i32_0 = arith.constant 0 : i32
    return %c0_i32, %arg1 : i32, i32
  }
  func.func @transform_3(%arg0: i32, %arg1: i32, %arg2: i32) -> (i32, i32) {
    %c0_i32 = arith.constant 0 : i32
    return %arg0, %arg1 : i32, i32
  }
}

</mosaic_0001>

<llo_original>
// kernel: linear_grad_forward.1
$region0: #{linear_grad_forward.1}
  #allocation0 [shape = 'u32[]', space=smem, size = 0x4, offset = 0x4, fixed_abs, tag = 'smem constant byte address 0x4 - core index']
  #allocation1 [shape = 'u32[144,128]{1,0:T(1,128)}', space=vmem, size = 0x12000, scoped, tag = 'internal scratch']
  %s0 = inlined_call_operand.hbm [shape: f32[8,32], index: 0, kind: input, shape index: {}]
  %s1 = inlined_call_operand.hbm [shape: f32[32,32], index: 1, kind: input, shape index: {}]
  %s2 = inlined_call_operand.vmem [shape: f32[1,32], index: 2, kind: input, shape index: {}]
  %s3 = inlined_call_operand.hbm [shape: f32[8,32], index: 3, kind: output, shape index: {}]
  %s4 = sld [smem:[#allocation0]]
  $region38: #{linear_grad_forward.1} parent=0
    _
  %s6 = ssub.s32 1, %s4
  %s7 = scalar_select 0, %s6, %s4
  $region1: #{linear_grad_forward.1} parent=0
    #allocation2 [shape = 'u8[4096]{0}', space=vmem, size = 0x1000, scoped, tag = 'input window, operand 0, single buffered']
    #allocation3 [shape = 's32[1]{0}', space=sflag, size = 0x4, scoped, tag = 'scoped memory for linear_grad_forward.1']
    #allocation4 [shape = 's32[1]{0}', space=sflag, size = 0x4, scoped, tag = 'scoped memory for linear_grad_forward.1']
    #allocation5 [shape = 'u8[16384]{0}', space=vmem, size = 0x4000, scoped, tag = 'input window, operand 1, single buffered']
    #allocation6 [shape = 's32[1]{0}', space=sflag, size = 0x4, scoped, tag = 'scoped memory for linear_grad_forward.1']
    #allocation7 [shape = 'u8[4096]{0}', space=vmem, size = 0x1000, scoped, tag = 'output window, operand 0, single buffered']
    %8 = vsyncpa [#allocation3], 0
    %9 = vsyncpa [#allocation6], 0
    %10 = vsyncpa [#allocation4], 0
    // Predicated region
    $region2: #{linear_grad_forward.1} parent=1 // pred_check
      _
    $region3: #{linear_grad_forward.1} parent=1 // pred_check_branch
      %12 = sbr.rel (0) target = $region5
    $region4: #{linear_grad_forward.1} parent=1 // pred_region
      %s14 = ssub.s32 128, 128
      %15 = vsyncadd [#allocation3], %s14
      %s17 = sshll.u32 [#allocation2], 4
      %s18 = int_to_ptr.vmem [resolvable:$true] %s17
      %20 = dma.hbm_to_vmem [thread:$0]  %s0, 128, %s18, [#allocation3]
    $region5: #{linear_grad_forward.1} parent=1 // pred_fallthru
      _
    // Predicated region
    $region6: #{linear_grad_forward.1} parent=1 // pred_check
      _
    $region7: #{linear_grad_forward.1} parent=1 // pred_check_branch
      %22 = sbr.rel (0) target = $region9
    $region8: #{linear_grad_forward.1} parent=1 // pred_region
      %s24 = ssub.s32 512, 512
      %25 = vsyncadd [#allocation6], %s24
      %s26 = sshll.u32 [#allocation5], 4
      %s27 = int_to_ptr.vmem [resolvable:$true] %s26
      %32 = dma.hbm_to_vmem [thread:$0]  %s1, 512, %s27, [#allocation6], 128, 128, 8
    $region9: #{linear_grad_forward.1} parent=1 // pred_fallthru
      _
    // Predicated region
    $region10: #{linear_grad_forward.1} parent=1 // pred_check
      _
    $region11: #{linear_grad_forward.1} parent=1 // pred_check_branch
      %34 = sbr.rel (0) target = $region13
    $region12: #{linear_grad_forward.1} parent=1 // pred_region
      _
    $region13: #{linear_grad_forward.1} parent=1 // pred_fallthru
      _
    // Predicated region
    $region14: #{linear_grad_forward.1} parent=1 // pred_check
      _
    $region15: #{linear_grad_forward.1} parent=1 // pred_check_branch
      %36 = sbr.rel (0) target = $region17
    $region16: #{linear_grad_forward.1} parent=1 // pred_region
      %37 = dma.done [#allocation3], 128
    $region17: #{linear_grad_forward.1} parent=1 // pred_fallthru
      _
    // Predicated region
    $region18: #{linear_grad_forward.1} parent=1 // pred_check
      _
    $region19: #{linear_grad_forward.1} parent=1 // pred_check_branch
      %39 = sbr.rel (0) target = $region21
    $region20: #{linear_grad_forward.1} parent=1 // pred_region
      %40 = dma.done [#allocation6], 512
    $region21: #{linear_grad_forward.1} parent=1 // pred_fallthru
      _
    %p41 = scmp.eq.s32.totalorder 0, 0
    // Predicated region
    $region22: #{linear_grad_forward.1} parent=1 // pred_check
      %p42 = pneg %p41
    $region23: #{linear_grad_forward.1} parent=1 // pred_check_branch
      %44 = sbr.rel (%p42) target = $region25
    $region24: #{linear_grad_forward.1} parent=1 // pred_region
      %vm45 = vcmask 261120
      %46 = vst.msk [vmem:[#allocation7] sm:$0xff] %vm45, 0.0
    $region25: #{linear_grad_forward.1} parent=1 // pred_fallthru
      _
    %v47 = vld [vmem:[#allocation7] sm:$0xff]
    %v48 = vld [vmem:[#allocation2] sm:$0xff]
    %v49 = vld [vmem:[#allocation5] sm:$0xff]
    %v50 = vld [vmem:[#allocation5 + $0x8] sm:$0xff]
    %v51 = vld [vmem:[#allocation5 + $0x10] sm:$0xff]
    %v52 = vld [vmem:[#allocation5 + $0x18] sm:$0xff]
    %vm53 = vcmask 261120
    %v55 = vsel %vm53, %v48, 0
    %v58 = vsel %vm53, %v49, 0
    %v61 = vsel %vm53, %v50, 0
    %v64 = vsel %vm53, %v51, 0
    %v67 = vsel %vm53, %v52, 0
    %69 = vmatprep.subr.mxu0 0.0
    %70 = vmatpush1.xpose.msra.mxu0 %v58
    %71 = vmatprep.subr.mxu0 0.0
    %72 = vmatpush1.xpose.msra.mxu0 %v61
    %73 = vmatprep.subr.mxu0 0.0
    %74 = vmatpush1.xpose.msra.mxu0 %v64
    %75 = vmatprep.subr.mxu0 0.0
    %76 = vmatpush1.xpose.msra.mxu0 %v67
    %77 = vmatprep.subr.mxu0 0.0
    %78 = vmatpush1.xpose.msra.mxu0 0.0
    %79 = vmatprep.subr.mxu0 0.0
    %80 = vmatpush1.xpose.msra.mxu0 0.0
    %81 = vmatprep.subr.mxu0 0.0
    %82 = vmatpush1.xpose.msra.mxu0 0.0
    %83 = vmatprep.subr.mxu0 0.0
    %84 = vmatpush1.xpose.msra.mxu0 0.0
    %85 = vmatprep.subr.mxu0 0.0
    %86 = vmatpush1.xpose.msra.mxu0 0.0
    %87 = vmatprep.subr.mxu0 0.0
    %88 = vmatpush1.xpose.msra.mxu0 0.0
    %89 = vmatprep.subr.mxu0 0.0
    %90 = vmatpush1.xpose.msra.mxu0 0.0
    %91 = vmatprep.subr.mxu0 0.0
    %92 = vmatpush1.xpose.msra.mxu0 0.0
    %93 = vmatprep.subr.mxu0 0.0
    %94 = vmatpush1.xpose.msra.mxu0 0.0
    %95 = vmatprep.subr.mxu0 0.0
    %96 = vmatpush1.xpose.msra.mxu0 0.0
    %97 = vmatprep.subr.mxu0 0.0
    %98 = vmatpush1.xpose.msra.mxu0 0.0
    %99 = vmatprep.subr.mxu0 0.0
    %100 = vmatpush1.xpose.msra.mxu0 0.0
    %101 = vmatprep.subr.mxu0 0.0
    %102 = vmatpush1.xpose.msra.mxu0 0.0
    %103 = vmatprep.subr.mxu0 0.0
    %104 = vmatpush1.xpose.msra.mxu0 0.0
    %105 = vmatprep.subr.mxu0 0.0
    %106 = vmatpush1.xpose.msra.mxu0 0.0
    %107 = vmatprep.subr.mxu0 0.0
    %108 = vmatpush1.xpose.msra.mxu0 0.0
    %109 = vmatprep.subr.mxu0 0.0
    %110 = vmatpush1.xpose.msra.mxu0 0.0
    %111 = vmatprep.subr.mxu0 0.0
    %112 = vmatpush1.xpose.msra.mxu0 0.0
    %113 = vmatprep.subr.mxu0 0.0
    %114 = vmatpush1.xpose.msra.mxu0 0.0
    %115 = vmatprep.subr.mxu0 0.0
    %116 = vmatpush1.xpose.msra.mxu0 0.0
    %117 = vmatprep.subr.mxu0 0.0
    %118 = vmatpush1.xpose.msra.mxu0 0.0
    %119 = vmatprep.subr.mxu0 0.0
    %120 = vmatpush1.xpose.msra.mxu0 0.0
    %121 = vmatprep.subr.mxu0 0.0
    %122 = vmatpush1.xpose.msra.mxu0 0.0
    %123 = vmatprep.subr.mxu0 0.0
    %124 = vmatpush1.xpose.msra.mxu0 0.0
    %125 = vmatprep.subr.mxu0 0.0
    %126 = vmatpush1.xpose.msra.mxu0 0.0
    %127 = vmatprep.subr.mxu0 0.0
    %128 = vmatpush1.xpose.msra.mxu0 0.0
    %129 = vmatprep.subr.mxu0 0.0
    %130 = vmatpush1.xpose.msra.mxu0 0.0
    %131 = vmatprep.subr.mxu0 0.0
    %132 = vmatpush1.xpose.msra.mxu0 0.0
    %133 = vmatprep.mubr.f32.mxu0 0.0
    %134 = vmatmul.mubr.f32.gmra.mrb[0].mxu0 %v55
    %v135 = vpop.f32.mrb[0].mxu0
    %v136 = vadd.f32 0.0, %v135
    %v137 = vpop.f32.mrb[0].mxu0
    %138 = vdwg.mxu0
    %v139 = vadd.f32 %v47, %v136
    %140 = vst.msk [vmem:[#allocation7] sm:$0xff] %vm53, %v139
    // Predicated region
    $region26: #{linear_grad_forward.1} parent=1 // pred_check
      %p141 = pneg %p41
    $region27: #{linear_grad_forward.1} parent=1 // pred_check_branch
      %143 = sbr.rel (%p141) target = $region29
    $region28: #{linear_grad_forward.1} parent=1 // pred_region
      %v144 = vld [vmem:[#allocation7] sm:$0xff]
      %v145 = vld [vmem:[%s2] sm:$0x1]
      %v147 = vlaneseq
      %v148 = vshrl.u32 %v147, 7
      %v149 = vsub.s32 0, %v148
      %v150 = vrot.slane %v145, %v149
      %v152 = vadd.f32 %v144, %v150
      %153 = vst.msk [vmem:[#allocation7] sm:$0xff] %vm53, %v152
    $region29: #{linear_grad_forward.1} parent=1 // pred_fallthru
      _
    // Predicated region
    $region30: #{linear_grad_forward.1} parent=1 // pred_check
      _
    $region31: #{linear_grad_forward.1} parent=1 // pred_check_branch
      %155 = sbr.rel (0) target = $region33
    $region32: #{linear_grad_forward.1} parent=1 // pred_region
      %s157 = ssub.s32 128, 128
      %158 = vsyncadd [#allocation4], %s157
      %s160 = sshll.u32 [#allocation7], 4
      %s161 = int_to_ptr.vmem [resolvable:$true] %s160
      %163 = dma.vmem_to_hbm [thread:$0]  %s161, 128, %s3, [#allocation4]
    $region33: #{linear_grad_forward.1} parent=1 // pred_fallthru
      _
    // Predicated region
    $region34: #{linear_grad_forward.1} parent=1 // pred_check
      _
    $region35: #{linear_grad_forward.1} parent=1 // pred_check_branch
      %165 = sbr.rel (0) target = $region37
    $region36: #{linear_grad_forward.1} parent=1 // pred_region
      %166 = dma.done [#allocation4], 128
    $region37: #{linear_grad_forward.1} parent=1 // pred_fallthru
      _
    %167 = vsyncpa [#allocation3], 1
    %168 = vsyncpa [#allocation6], 1
    %169 = vsyncpa [#allocation4], 1

</llo_original>
